<compile_context>
chip_gen: v5e
topology: v5e:2x2
jax: 0.10.0
libtpu: 0.0.40
codegen_flags: <defaults>
</compile_context>

<pallas_src>
import functools
import math

import jax
import jax.numpy as jnp
from jax.experimental import pallas as pl
from jax.experimental.pallas import tpu as pltpu


# ---------------------------------------------------------------------------
# Kernel: two lane-dense 2-D MXU matmuls (+ bias) per grid step.
# ---------------------------------------------------------------------------
def _gcn_kernel(x_ref, w_ref, att_ref, *rest, reassociate, has_bias):
    # x_ref:   (N, G*Fin_p)           folded batch tile, compute dtype
    # w_ref:   (G*Fin_p, G*Fout_p)    block-diagonal kron(I_G, W), grid-invariant
    # att_ref: (N, N)                 grid-invariant
    # b_ref:   (1, G*Fout_p) float32  (only if has_bias), grid-invariant
    # o_ref:   (N, G*Fout_p)
    if has_bias:
        b_ref, o_ref = rest
    else:
        (o_ref,) = rest

    x = x_ref[...]
    w = w_ref[...]
    att = att_ref[...]

    if reassociate:
        # y = (att @ x) @ Wbd   -- att-matmul lane width is G*Fin_p <= G*Fout_p.
        z = jnp.dot(att, x, preferred_element_type=jnp.float32)
        y = jnp.dot(z.astype(w.dtype), w, preferred_element_type=jnp.float32)
    else:
        # y = att @ (x @ Wbd)   -- att-matmul lane width is G*Fout_p < G*Fin_p.
        s = jnp.dot(x, w, preferred_element_type=jnp.float32)
        y = jnp.dot(att, s.astype(att.dtype), preferred_element_type=jnp.float32)

    if has_bias:
        y = y + b_ref[...]              # (1, G*Fout_p) broadcasts over sublanes

    o_ref[...] = y.astype(o_ref.dtype)


# ---------------------------------------------------------------------------
# Geometry / budget helpers
# ---------------------------------------------------------------------------
def _pad_feature(f):
    """Pad a feature dim so it divides 128 (next pow2 below 128) or is a
    multiple of 128 (above).  Guarantees folded lane widths are 128-multiples."""
    if f >= 128:
        return -(-f // 128) * 128
    p = 1
    while p < f:
        p *= 2
    return p


def _padded_bytes(shape, dtype):
    """VMEM bytes of an array once padded to (sublane, 128-lane) tiles."""
    itemsize = jnp.dtype(dtype).itemsize
    sub = max(8, 32 // itemsize)                  # 8 for f32, 16 for bf16
    shape = tuple(shape)
    if len(shape) < 2:
        shape = (1,) * (2 - len(shape)) + shape
    lead = math.prod(shape[:-2]) if len(shape) > 2 else 1
    rows = -(-shape[-2] // sub) * sub
    cols = -(-shape[-1] // 128) * 128
    return lead * rows * cols * itemsize


def _vmem_capacity_bytes():
    try:
        return int(pltpu.get_tpu_info().vmem_capacity_bytes)
    except Exception:
        return 64 * 1024 * 1024                   # conservative: v7x per-TC VMEM


def _step_vmem_bytes(N, G, Fin_p, Fout_p, cdt, out_dtype, has_bias):
    """Resident VMEM of one grid step: double-buffered x/out blocks, the
    grid-invariant operands (counted double-buffered to be safe) and the f32
    intermediates materialized between the two matmuls."""
    fixed = 2 * (_padded_bytes((G * Fin_p, G * Fout_p), cdt)
                 + _padded_bytes((N, N), cdt)
                 + (_padded_bytes((1, G * Fout_p), jnp.float32) if has_bias else 0))
    blocks = 2 * (_padded_bytes((N, G * Fin_p), cdt)
                  + _padded_bytes((N, G * Fout_p), out_dtype))
    interm = (_padded_bytes((N, G * Fin_p), jnp.float32)
              + _padded_bytes((N, G * Fout_p), jnp.float32))
    return fixed + blocks + interm


def _choose_fold(B, N, Fin_p, Fout_p, cdt, out_dtype, has_bias, budget):
    """Fold factor G: number of batch elements sharing one grid step's lanes."""
    # Minimum fold for full lane density; since Fin_p/Fout_p divide 128 (or are
    # multiples of it), G*Fin_p and G*Fout_p are then multiples of 128.
    G = max(1, 128 // min(Fin_p, 128), 128 // min(Fout_p, 128))
    # Grow G (pow2) to cut grid steps while bounding kron(I_G, W) size / wasted
    # weight-matmul FLOPs, not inflating the padded batch, and staying in VMEM.
    while pl.cdiv(B, G) > 1:
        G2 = G * 2
        if G2 * max(Fin_p, Fout_p) > 512:
            break
        if pl.cdiv(B, G2) * G2 > pl.cdiv(B, G) * G:
            break
        if _step_vmem_bytes(N, G2, Fin_p, Fout_p, cdt, out_dtype, has_bias) > budget:
            break
        G = G2
    return G
    # TODO(synk): if a single fold-group ever exceeds the VMEM budget (huge
    # Fin/Fout), add a feature-dim reduction grid; realistic GCN shapes fit.


# ---------------------------------------------------------------------------
# Wrapper
# ---------------------------------------------------------------------------
def graph_convolution(x, weight, att, bias=None, *, compute_dtype=jnp.bfloat16):
    """Pallas TPU implementation of GraphConvolution.forward.

    x: (B, N, Fin); weight: (Fin, Fout); att: (N, N); bias: (Fout,) or None.
    Returns (B, N, Fout) in x.dtype (f32 MXU accumulation inside the kernel).
    """
    B, N, Fin = x.shape
    Fin_w, Fout = weight.shape
    assert Fin_w == Fin and att.shape == (N, N)
    if bias is not None:
        assert bias.shape == (Fout,)

    out_dtype = x.dtype
    cdt = jnp.dtype(x.dtype) if compute_dtype is None else jnp.dtype(compute_dtype)
    has_bias = bias is not None

    # ---- generation-aware VMEM budget (query-driven; v7x only has 64 MiB) ---
    phys = _vmem_capacity_bytes()
    vmem_limit = int(min(0.8 * phys, 100 * 1024 * 1024))   # ~51 MiB v7x, 100 MiB v5e/v6e
    budget = int(min(0.6 * vmem_limit, 48 * 1024 * 1024))

    # ---- fold geometry -------------------------------------------------------
    Fin_p = _pad_feature(Fin)
    Fout_p = _pad_feature(Fout)
    G = _choose_fold(B, N, Fin_p, Fout_p, cdt, out_dtype, has_bias, budget)
    B_pad = pl.cdiv(B, G) * G
    steps = B_pad // G

    # Reassociation on padded/folded widths (weight matmul identical either way).
    reassociate = Fin_p <= Fout_p

    # ---- wrapper-side layout (one-time XLA ops; kernel stays reshape-free) --
    x_c = jnp.pad(x.astype(cdt), ((0, B_pad - B), (0, 0), (0, Fin_p - Fin)))
    x2d = jnp.transpose(x_c, (1, 0, 2)).reshape(N, B_pad * Fin_p)

    w_f32 = jnp.pad(weight.astype(jnp.float32),
                    ((0, Fin_p - Fin), (0, Fout_p - Fout)))
    wbd = jnp.kron(jnp.eye(G, dtype=jnp.float32), w_f32).astype(cdt)

    att_c = att.astype(cdt)

    in_specs = [
        pl.BlockSpec((N, G * Fin_p), lambda i: (0, i)),
        # Grid-invariant operands: constant index maps -> fetched once.
        pl.BlockSpec((G * Fin_p, G * Fout_p), lambda i: (0, 0)),
        pl.BlockSpec((N, N), lambda i: (0, 0)),
    ]
    args = [x2d, wbd, att_c]
    if has_bias:
        b_pad = jnp.pad(bias.astype(jnp.float32), (0, Fout_p - Fout))
        b2d = jnp.tile(b_pad, (G,)).reshape(1, G * Fout_p)
        in_specs.append(pl.BlockSpec((1, G * Fout_p), lambda i: (0, 0)))
        args.append(b2d)

    # ---- cost estimate -------------------------------------------------------
    f_att = Fin_p if reassociate else Fout_p
    flops = 2 * steps * (N * N * (G * f_att) + N * (G * Fin_p) * (G * Fout_p))
    if has_bias:
        flops += B_pad * N * Fout_p
    bytes_accessed = (x2d.size * cdt.itemsize
                      + wbd.size * cdt.itemsize
                      + att_c.size * cdt.itemsize
                      + (G * Fout_p * 4 if has_bias else 0)
                      + N * B_pad * Fout_p * jnp.dtype(out_dtype).itemsize)

    kernel = functools.partial(_gcn_kernel,
                               reassociate=reassociate, has_bias=has_bias)

    out2d = pl.pallas_call(
        kernel,
        out_shape=jax.ShapeDtypeStruct((N, B_pad * Fout_p), out_dtype),
        grid_spec=pltpu.PrefetchScalarGridSpec(
            num_scalar_prefetch=0,
            grid=(steps,),
            in_specs=in_specs,
            out_specs=pl.BlockSpec((N, G * Fout_p), lambda i: (0, i)),
        ),
        compiler_params=pltpu.CompilerParams(
            dimension_semantics=("parallel",),
            vmem_limit_bytes=vmem_limit),
        cost_estimate=pl.CostEstimate(
            flops=int(flops), transcendentals=0,
            bytes_accessed=int(bytes_accessed)),
    )(*args)

    # ---- un-fold: (N, B_pad*Fout_p) -> (B, N, Fout) --------------------------
    y = out2d.reshape(N, B_pad, Fout_p)[:, :B, :Fout]
    return jnp.transpose(y, (1, 0, 2))


# ---------------------------------------------------------------------------
# Parameter init (matches reset_parameters())
# ---------------------------------------------------------------------------
def init_params(key, in_features, out_features, node_n, bias=True):
    stdv = 1.0 / math.sqrt(out_features)
    k_w, k_a, k_b = jax.random.split(key, 3)
    weight = jax.random.uniform(k_w, (in_features, out_features),
                                minval=-stdv, maxval=stdv, dtype=jnp.float32)
    att = jax.random.uniform(k_a, (node_n, node_n),
                             minval=-stdv, maxval=stdv, dtype=jnp.float32)
    b = None
    if bias:
        b = jax.random.uniform(k_b, (out_features,),
                               minval=-stdv, maxval=stdv, dtype=jnp.float32)
    return weight, att, b


if __name__ == "__main__":
    key = jax.random.PRNGKey(0)
    k_x, k_p, k_x2, k_p2, k_x3, k_p3 = jax.random.split(key, 6)

    # Small shapes consistent with the module defaults (node_n=48).
    B, node_n, in_features, out_features = 2, 48, 16, 32
    x = jax.random.normal(k_x, (B, node_n, in_features), dtype=jnp.float32)
    weight, att, bias = init_params(k_p, in_features, out_features, node_n,
                                    bias=True)
    ref = jnp.matmul(att, jnp.matmul(x, weight)) + bias      # f32 reference

    # 1) bf16 compute / f32 accumulate (default): loose tolerance vs f32 ref.
    y = jax.block_until_ready(graph_convolution(x, weight, att, bias))
    assert y.shape == (B, node_n, out_features)
    assert y.dtype == x.dtype
    assert jnp.allclose(y, ref, atol=3e-2, rtol=3e-2)

    # 2) f32 compute path: tight tolerance (only association order differs).
    y32 = jax.block_until_ready(
        graph_convolution(x, weight, att, bias, compute_dtype=jnp.float32))
    assert jnp.allclose(y32, ref, atol=1e-4, rtol=1e-4)

    # 3) bias=None specialization.
    y_nb = jax.block_until_ready(
        graph_convolution(x, weight, att, None, compute_dtype=jnp.float32))
    assert jnp.allclose(y_nb, ref - bias, atol=1e-4, rtol=1e-4)

    # 4) Fin > Fout -> non-reassociated order, single fold-group.
    B2, Fin2, Fout2 = 8, 32, 16
    x2 = jax.random.normal(k_x2, (B2, node_n, Fin2), dtype=jnp.float32)
    w2, att2, b2 = init_params(k_p2, Fin2, Fout2, node_n, bias=True)
    ref2 = jnp.matmul(att2, jnp.matmul(x2, w2)) + b2
    y2 = jax.block_until_ready(
        graph_convolution(x2, w2, att2, b2, compute_dtype=jnp.float32))
    assert jnp.allclose(y2, ref2, atol=1e-4, rtol=1e-4)

    # 5) Larger, non-divisible batch -> multi-step grid with batch padding and
    #    128-multiple folded BlockSpecs.
    B3, Fin3, Fout3 = 20, 16, 32
    x3 = jax.random.normal(k_x3, (B3, node_n, Fin3), dtype=jnp.float32)
    w3, att3, b3 = init_params(k_p3, Fin3, Fout3, node_n, bias=True)
    ref3 = jnp.matmul(att3, jnp.matmul(x3, w3)) + b3
    y3 = jax.block_until_ready(
        graph_convolution(x3, w3, att3, b3, compute_dtype=jnp.float32))
    assert y3.shape == (B3, node_n, Fout3)
    assert jnp.allclose(y3, ref3, atol=1e-4, rtol=1e-4)

    print("KERNEL_OK")
</pallas_src>

<mosaic_0001>
module attributes {stable_mosaic.version = 11 : i64} {
  func.func @_gcn_kernel(%arg0: i32, %arg1: memref<48x128xbf16, #tpu.memory_space<vmem>>, %arg2: memref<128x256xbf16, #tpu.memory_space<vmem>>, %arg3: memref<48x48xbf16, #tpu.memory_space<vmem>>, %arg4: memref<1x256xf32, #tpu.memory_space<vmem>>, %arg5: memref<48x256xf32, #tpu.memory_space<vmem>>) attributes {dimension_semantics = [#tpu.dimension_semantics<parallel>], iteration_bounds = array<i64: 1>, scalar_prefetch = 0 : i64, scratch_operands = 0 : i64, tpu.core_type = #tpu.core_type<tc>, window_params = [{transform_indices = @transform_0, window_bounds = array<i64: 48, 128>}, {pipeline_mode = #tpu.pipeline_mode<synchronous>, transform_indices = @transform_1, window_bounds = array<i64: 128, 256>}, {pipeline_mode = #tpu.pipeline_mode<synchronous>, transform_indices = @transform_2, window_bounds = array<i64: 48, 48>}, {pipeline_mode = #tpu.pipeline_mode<synchronous>, transform_indices = @transform_3, window_bounds = array<i64: 1, 256>}, {transform_indices = @transform_4, window_bounds = array<i64: 48, 256>}]} {
    %c0 = arith.constant 0 : index
    %c0_0 = arith.constant 0 : index
    %0 = vector.load %arg1[%c0, %c0_0] : memref<48x128xbf16, #tpu.memory_space<vmem>>, vector<48x128xbf16>
    %c0_1 = arith.constant 0 : index
    %c0_2 = arith.constant 0 : index
    %1 = vector.load %arg2[%c0_1, %c0_2] : memref<128x256xbf16, #tpu.memory_space<vmem>>, vector<128x256xbf16>
    %c0_3 = arith.constant 0 : index
    %c0_4 = arith.constant 0 : index
    %2 = vector.load %arg3[%c0_3, %c0_4] : memref<48x48xbf16, #tpu.memory_space<vmem>>, vector<48x48xbf16>
    %cst = arith.constant dense<0.000000e+00> : vector<48x128xf32>
    %3 = tpu.matmul %2, %0, %cst {dimension_numbers = #tpu.dot_dimension_numbers<[1], [0], [0], [1], [0, 0, 1, 1], [], []>} : vector<48x48xbf16>, vector<48x128xbf16>, vector<48x128xf32> -> vector<48x128xf32>
    %4 = arith.truncf %3 : vector<48x128xf32> to vector<48x128xbf16>
    %cst_5 = arith.constant dense<0.000000e+00> : vector<48x256xf32>
    %5 = tpu.matmul %4, %1, %cst_5 {dimension_numbers = #tpu.dot_dimension_numbers<[1], [0], [0], [1], [0, 0, 1, 1], [], []>} : vector<48x128xbf16>, vector<128x256xbf16>, vector<48x256xf32> -> vector<48x256xf32>
    %c0_6 = arith.constant 0 : index
    %c0_7 = arith.constant 0 : index
    %6 = vector.load %arg4[%c0_6, %c0_7] : memref<1x256xf32, #tpu.memory_space<vmem>>, vector<1x256xf32>
    %7 = vector.broadcast %6 : vector<1x256xf32> to vector<48x256xf32>
    %8 = arith.addf %5, %7 : vector<48x256xf32>
    %c0_8 = arith.constant 0 : index
    %c0_9 = arith.constant 0 : index
    %9 = vector.load %arg5[%c0_8, %c0_9] : memref<48x256xf32, #tpu.memory_space<vmem>>, vector<48x256xf32>
    tpu.vector_store %arg5[%c0_8, %c0_9], %8 {strides = array<i32>} : memref<48x256xf32, #tpu.memory_space<vmem>>, vector<48x256xf32>,
    return
  }
  func.func @transform_0(%arg0: i32) -> (i32, i32) {
    %c0_i32 = arith.constant 0 : i32
    %c0_i32_0 = arith.constant 0 : i32
    return %c0_i32, %arg0 : i32, i32
  }
  func.func @transform_1(%arg0: i32) -> (i32, i32) {
    %c0_i32 = arith.constant 0 : i32
    %c0_i32_0 = arith.constant 0 : i32
    %c0_i32_1 = arith.constant 0 : i32
    return %c0_i32, %c0_i32_0 : i32, i32
  }
  func.func @transform_2(%arg0: i32) -> (i32, i32) {
    %c0_i32 = arith.constant 0 : i32
    %c0_i32_0 = arith.constant 0 : i32
    %c0_i32_1 = arith.constant 0 : i32
    return %c0_i32, %c0_i32_0 : i32, i32
  }
  func.func @transform_3(%arg0: i32) -> (i32, i32) {
    %c0_i32 = arith.constant 0 : i32
    %c0_i32_0 = arith.constant 0 : i32
    %c0_i32_1 = arith.constant 0 : i32
    return %c0_i32, %c0_i32_0 : i32, i32
  }
  func.func @transform_4(%arg0: i32) -> (i32, i32) {
    %c0_i32 = arith.constant 0 : i32
    %c0_i32_0 = arith.constant 0 : i32
    return %c0_i32, %arg0 : i32, i32
  }
}

</mosaic_0001>

<llo_original>
// kernel: tpu_custom_call.1
$region0: #{tpu_custom_call.1}
  #allocation0 [shape = 'u32[]', space=smem, size = 0x4, offset = 0x4, fixed_abs, tag = 'smem constant byte address 0x4 - core index']
  #allocation1 [shape = 'u32[72,128]{1,0:T(1,128)}', space=vmem, size = 0x9000, scoped, tag = 'internal scratch']
  %s0 = inlined_call_operand.hbm [shape: bf16[48,128], index: 0, kind: input, shape index: {}]
  %s1 = inlined_call_operand.hbm [shape: bf16[128,256], index: 1, kind: input, shape index: {}]
  %s2 = inlined_call_operand.hbm [shape: bf16[48,48], index: 2, kind: input, shape index: {}]
  %s3 = inlined_call_operand.vmem [shape: f32[1,256], index: 3, kind: input, shape index: {}]
  %s4 = inlined_call_operand.hbm [shape: f32[48,256], index: 4, kind: output, shape index: {}]
  %s5 = sld [smem:[#allocation0]]
  $region38: #{tpu_custom_call.1} parent=0
    _
  %s7 = ssub.s32 1, %s5
  %s8 = scalar_select 0, %s7, %s5
  $region1: #{tpu_custom_call.1} parent=0
    #allocation2 [shape = 'u8[12288]{0}', space=vmem, size = 0x3000, scoped, tag = 'input window, operand 0, single buffered']
    #allocation3 [shape = 's32[1]{0}', space=sflag, size = 0x4, scoped, tag = 'scoped memory for tpu_custom_call.1']
    #allocation4 [shape = 's32[1]{0}', space=sflag, size = 0x4, scoped, tag = 'scoped memory for tpu_custom_call.1']
    #allocation5 [shape = 'u8[65536]{0}', space=vmem, size = 0x10000, scoped, tag = 'input window, operand 1, single buffered']
    #allocation6 [shape = 's32[1]{0}', space=sflag, size = 0x4, scoped, tag = 'scoped memory for tpu_custom_call.1']
    #allocation7 [shape = 'u8[12288]{0}', space=vmem, size = 0x3000, scoped, tag = 'input window, operand 2, single buffered']
    #allocation8 [shape = 'u8[49152]{0}', space=vmem, size = 0xc000, scoped, tag = 'output window, operand 0, single buffered']
    %9 = vsyncpa [#allocation3], 0
    %10 = vsyncpa [#allocation6], 0
    %11 = vsyncpa [#allocation4], 0
    // Predicated region
    $region2: #{tpu_custom_call.1} parent=1 // pred_check
      _
    $region3: #{tpu_custom_call.1} parent=1 // pred_check_branch
      %13 = sbr.rel (0) target = $region5
    $region4: #{tpu_custom_call.1} parent=1 // pred_region
      %15 = vsyncadd [#allocation3], 0
      %s16 = sshll.u32 %s0, 4
      %s17 = int_to_ptr.hbm [resolvable:$true] %s16
      %s18 = sshll.u32 [#allocation2], 4
      %s19 = int_to_ptr.vmem [resolvable:$true] %s18
      %24 = dma.hbm_to_vmem [thread:$0]  %s17, 384, %s19, [#allocation3], 64, 64, 4
    $region5: #{tpu_custom_call.1} parent=1 // pred_fallthru
      _
    // Predicated region
    $region6: #{tpu_custom_call.1} parent=1 // pred_check
      _
    $region7: #{tpu_custom_call.1} parent=1 // pred_check_branch
      %26 = sbr.rel (0) target = $region9
    $region8: #{tpu_custom_call.1} parent=1 // pred_region
      %28 = vsyncadd [#allocation6], 0
      %s29 = sshll.u32 %s1, 4
      %s30 = int_to_ptr.hbm [resolvable:$true] %s29
      %s31 = sshll.u32 [#allocation5], 4
      %s32 = int_to_ptr.vmem [resolvable:$true] %s31
      %37 = dma.hbm_to_vmem [thread:$0]  %s30, 2048, %s32, [#allocation6], 128, 128, 8
    $region9: #{tpu_custom_call.1} parent=1 // pred_fallthru
      _
    // Predicated region
    $region10: #{tpu_custom_call.1} parent=1 // pred_check
      _
    $region11: #{tpu_custom_call.1} parent=1 // pred_check_branch
      %39 = sbr.rel (0) target = $region13
    $region12: #{tpu_custom_call.1} parent=1 // pred_region
      %41 = vsyncadd [#allocation6], 0
      %s42 = sshll.u32 %s2, 4
      %s43 = int_to_ptr.hbm [resolvable:$true] %s42
      %s44 = sshll.u32 [#allocation7], 4
      %s45 = int_to_ptr.vmem [resolvable:$true] %s44
      %50 = dma.hbm_to_vmem [thread:$0]  %s43, 384, %s45, [#allocation6], 64, 64, 4
    $region13: #{tpu_custom_call.1} parent=1 // pred_fallthru
      _
    // Predicated region
    $region14: #{tpu_custom_call.1} parent=1 // pred_check
      _
    $region15: #{tpu_custom_call.1} parent=1 // pred_check_branch
      %52 = sbr.rel (0) target = $region17
    $region16: #{tpu_custom_call.1} parent=1 // pred_region
      _
    $region17: #{tpu_custom_call.1} parent=1 // pred_fallthru
      _
    // Predicated region
    $region18: #{tpu_custom_call.1} parent=1 // pred_check
      _
    $region19: #{tpu_custom_call.1} parent=1 // pred_check_branch
      %54 = sbr.rel (0) target = $region21
    $region20: #{tpu_custom_call.1} parent=1 // pred_region
      %56 = dma.done [#allocation3], 384
    $region21: #{tpu_custom_call.1} parent=1 // pred_fallthru
      _
    // Predicated region
    $region22: #{tpu_custom_call.1} parent=1 // pred_check
      _
    $region23: #{tpu_custom_call.1} parent=1 // pred_check_branch
      %58 = sbr.rel (0) target = $region25
    $region24: #{tpu_custom_call.1} parent=1 // pred_region
      %60 = dma.done [#allocation6], 2048
    $region25: #{tpu_custom_call.1} parent=1 // pred_fallthru
      _
    // Predicated region
    $region26: #{tpu_custom_call.1} parent=1 // pred_check
      _
    $region27: #{tpu_custom_call.1} parent=1 // pred_check_branch
      %62 = sbr.rel (0) target = $region29
    $region28: #{tpu_custom_call.1} parent=1 // pred_region
      %64 = dma.done [#allocation6], 384
    $region29: #{tpu_custom_call.1} parent=1 // pred_fallthru
      _
    %v66 = vld [vmem:[#allocation2] sm:$0xf]
    %v67 = vld [vmem:[#allocation2 + $0x4] sm:$0xf]
    %v68 = vld [vmem:[#allocation2 + $0x8] sm:$0xf]
    %v69 = vld [vmem:[#allocation2 + $0xc] sm:$0xf]
    %v70 = vld [vmem:[#allocation2 + $0x10] sm:$0xf]
    %v71 = vld [vmem:[#allocation2 + $0x14] sm:$0xf]
    %v72 = vld [vmem:[#allocation5] sm:$0xff]
    %v73 = vld [vmem:[#allocation5 + $0x8] sm:$0xff]
    %v74 = vld [vmem:[#allocation5 + $0x10] sm:$0xff]
    %v75 = vld [vmem:[#allocation5 + $0x18] sm:$0xff]
    %v76 = vld [vmem:[#allocation5 + $0x20] sm:$0xff]
    %v77 = vld [vmem:[#allocation5 + $0x28] sm:$0xff]
    %v78 = vld [vmem:[#allocation5 + $0x30] sm:$0xff]
    %v79 = vld [vmem:[#allocation5 + $0x38] sm:$0xff]
    %v80 = vld [vmem:[#allocation5 + $0x40] sm:$0xff]
    %v81 = vld [vmem:[#allocation5 + $0x48] sm:$0xff]
    %v82 = vld [vmem:[#allocation5 + $0x50] sm:$0xff]
    %v83 = vld [vmem:[#allocation5 + $0x58] sm:$0xff]
    %v84 = vld [vmem:[#allocation5 + $0x60] sm:$0xff]
    %v85 = vld [vmem:[#allocation5 + $0x68] sm:$0xff]
    %v86 = vld [vmem:[#allocation5 + $0x70] sm:$0xff]
    %v87 = vld [vmem:[#allocation5 + $0x78] sm:$0xff]
    %v88 = vld [vmem:[#allocation7] sm:$0xf]
    %v89 = vld [vmem:[#allocation7 + $0x4] sm:$0xf]
    %v90 = vld [vmem:[#allocation7 + $0x8] sm:$0xf]
    %v91 = vld [vmem:[#allocation7 + $0xc] sm:$0xf]
    %v92 = vld [vmem:[#allocation7 + $0x10] sm:$0xf]
    %v93 = vld [vmem:[#allocation7 + $0x14] sm:$0xf]
    %v100 = vunpack.c.l.b16 %v88
    %v101 = vunpack.c.l.b16 %v89
    %v102 = vunpack.c.l.b16 %v90
    %v103 = vunpack.c.l.b16 %v91
    %v104 = vunpack.c.l.b16 %v92
    %v105 = vunpack.c.l.b16 %v93
    %v106 = vpack.c.b16 %v101, %v100
    %v107 = vpack.c.b16 %v103, %v102
    %v108 = vpack.c.b16 %v105, %v104
    %v115 = vunpack.c.l.b16 %v66
    %v116 = vunpack.c.l.b16 %v67
    %v117 = vunpack.c.l.b16 %v68
    %v118 = vunpack.c.l.b16 %v69
    %v119 = vunpack.c.l.b16 %v70
    %v120 = vunpack.c.l.b16 %v71
    %v121 = vpack.c.b16 %v116, %v115
    %v122 = vpack.c.b16 %v118, %v117
    %v123 = vpack.c.b16 %v120, %v119
    %vm127 = vcmask 392192
    %v129 = vsel %vm127, %v106, 0
    %v132 = vsel %vm127, %v107, 0
    %v135 = vsel %vm127, %v108, 0
    %137 = vmatpush.bf16.msra.mxu0 0
    %138 = vmatpush.bf16.msra.mxu0 0
    %139 = vmatpush.bf16.msra.mxu0 0
    %140 = vmatpush.bf16.msra.mxu0 0
    %141 = vmatpush.bf16.msra.mxu0 0
    %142 = vmatpush.bf16.msra.mxu0 %v123
    %143 = vmatpush.bf16.msra.mxu0 %v122
    %144 = vmatpush.bf16.msra.mxu0 %v121
    %145 = vmatmul.bf16.gmra.mxu0 %v129
    %v146 = vpop.f32.mrf.mxu0
    %v147 = vadd.f32 0.0, %v146
    %v148 = vpop.f32.mrf.mxu0
    %v149 = vadd.f32 0.0, %v148
    %150 = vmatmul.bf16.gmra.mxu0 %v132
    %v151 = vpop.f32.mrf.mxu0
    %v152 = vadd.f32 0.0, %v151
    %v153 = vpop.f32.mrf.mxu0
    %v154 = vadd.f32 0.0, %v153
    %155 = vmatmul.bf16.gmra.mxu0 %v135
    %v156 = vpop.f32.mrf.mxu0
    %v157 = vadd.f32 0.0, %v156
    %v158 = vpop.f32.mrf.mxu0
    %v159 = vadd.f32 0.0, %v158
    %160 = vdwg.mxu0
    %v161 = vpack.c.bf16 %v149, %v147
    %v162 = vpack.c.bf16 %v154, %v152
    %v163 = vpack.c.bf16 %v159, %v157
    %v164 = vld [vmem:[%s3] sm:$0x3]
    %v166 = vperm.slane %v164, 0
    %v167 = vperm.slane %v164, 1
    %v186 = vunpack.c.l.b16 %v72
    %v187 = vunpack.c.h.b16 %v72
    %v188 = vunpack.c.l.b16 %v73
    %v189 = vunpack.c.h.b16 %v73
    %v190 = vunpack.c.l.b16 %v74
    %v191 = vunpack.c.h.b16 %v74
    %v192 = vunpack.c.l.b16 %v75
    %v193 = vunpack.c.h.b16 %v75
    %v194 = vunpack.c.l.b16 %v76
    %v195 = vunpack.c.h.b16 %v76
    %v196 = vunpack.c.l.b16 %v77
    %v197 = vunpack.c.h.b16 %v77
    %v198 = vunpack.c.l.b16 %v78
    %v199 = vunpack.c.h.b16 %v78
    %v200 = vunpack.c.l.b16 %v79
    %v201 = vunpack.c.h.b16 %v79
    %v202 = vunpack.c.l.b16 %v80
    %v203 = vunpack.c.h.b16 %v80
    %v204 = vunpack.c.l.b16 %v81
    %v205 = vunpack.c.h.b16 %v81
    %v206 = vunpack.c.l.b16 %v82
    %v207 = vunpack.c.h.b16 %v82
    %v208 = vunpack.c.l.b16 %v83
    %v209 = vunpack.c.h.b16 %v83
    %v210 = vunpack.c.l.b16 %v84
    %v211 = vunpack.c.h.b16 %v84
    %v212 = vunpack.c.l.b16 %v85
    %v213 = vunpack.c.h.b16 %v85
    %v214 = vunpack.c.l.b16 %v86
    %v215 = vunpack.c.h.b16 %v86
    %v216 = vunpack.c.l.b16 %v87
    %v217 = vunpack.c.h.b16 %v87
    %v218 = vpack.c.b16 %v188, %v186
    %v219 = vpack.c.b16 %v189, %v187
    %v220 = vpack.c.b16 %v192, %v190
    %v221 = vpack.c.b16 %v193, %v191
    %v222 = vpack.c.b16 %v196, %v194
    %v223 = vpack.c.b16 %v197, %v195
    %v224 = vpack.c.b16 %v200, %v198
    %v225 = vpack.c.b16 %v201, %v199
    %v226 = vpack.c.b16 %v204, %v202
    %v227 = vpack.c.b16 %v205, %v203
    %v228 = vpack.c.b16 %v208, %v206
    %v229 = vpack.c.b16 %v209, %v207
    %v230 = vpack.c.b16 %v212, %v210
    %v231 = vpack.c.b16 %v213, %v211
    %v232 = vpack.c.b16 %v216, %v214
    %v233 = vpack.c.b16 %v217, %v215
    %250 = vmatpush.bf16.msra.mxu0 %v232
    %251 = vmatpush.bf16.msra.mxu0 %v230
    %252 = vmatpush.bf16.msra.mxu0 %v228
    %253 = vmatpush.bf16.msra.mxu0 %v226
    %254 = vmatpush.bf16.msra.mxu0 %v224
    %255 = vmatpush.bf16.msra.mxu0 %v222
    %256 = vmatpush.bf16.msra.mxu0 %v220
    %257 = vmatpush.bf16.msra.mxu0 %v218
    %258 = vmatmul.bf16.gmra.mxu0 %v161
    %v259 = vpop.f32.mrf.mxu0
    %v260 = vadd.f32 %v166, %v259
    %v261 = vpop.f32.mrf.mxu0
    %v262 = vadd.f32 %v166, %v261
    %263 = vmatmul.bf16.gmra.mxu0 %v162
    %v264 = vpop.f32.mrf.mxu0
    %v265 = vadd.f32 %v166, %v264
    %v266 = vpop.f32.mrf.mxu0
    %v267 = vadd.f32 %v166, %v266
    %268 = vmatmul.bf16.gmra.mxu0 %v163
    %v269 = vpop.f32.mrf.mxu0
    %v270 = vadd.f32 %v166, %v269
    %v271 = vpop.f32.mrf.mxu0
    %v272 = vadd.f32 %v166, %v271
    %273 = vdwg.mxu0
    %274 = vmatpush.bf16.msra.mxu0 %v233
    %275 = vmatpush.bf16.msra.mxu0 %v231
    %276 = vmatpush.bf16.msra.mxu0 %v229
    %277 = vmatpush.bf16.msra.mxu0 %v227
    %278 = vmatpush.bf16.msra.mxu0 %v225
    %279 = vmatpush.bf16.msra.mxu0 %v223
    %280 = vmatpush.bf16.msra.mxu0 %v221
    %281 = vmatpush.bf16.msra.mxu0 %v219
    %282 = vmatmul.bf16.gmra.mxu0 %v161
    %v283 = vpop.f32.mrf.mxu0
    %v284 = vadd.f32 %v167, %v283
    %v285 = vpop.f32.mrf.mxu0
    %v286 = vadd.f32 %v167, %v285
    %287 = vmatmul.bf16.gmra.mxu0 %v162
    %v288 = vpop.f32.mrf.mxu0
    %v289 = vadd.f32 %v167, %v288
    %v290 = vpop.f32.mrf.mxu0
    %v291 = vadd.f32 %v167, %v290
    %292 = vmatmul.bf16.gmra.mxu0 %v163
    %v293 = vpop.f32.mrf.mxu0
    %v294 = vadd.f32 %v167, %v293
    %v295 = vpop.f32.mrf.mxu0
    %v296 = vadd.f32 %v167, %v295
    %297 = vdwg.mxu0
    %298 = vst [vmem:[#allocation8] sm:$0xff] %v260
    %299 = vst [vmem:[#allocation8 + $0x8] sm:$0xff] %v284
    %300 = vst [vmem:[#allocation8 + $0x10] sm:$0xff] %v262
    %301 = vst [vmem:[#allocation8 + $0x18] sm:$0xff] %v286
    %302 = vst [vmem:[#allocation8 + $0x20] sm:$0xff] %v265
    %303 = vst [vmem:[#allocation8 + $0x28] sm:$0xff] %v289
    %304 = vst [vmem:[#allocation8 + $0x30] sm:$0xff] %v267
    %305 = vst [vmem:[#allocation8 + $0x38] sm:$0xff] %v291
    %306 = vst [vmem:[#allocation8 + $0x40] sm:$0xff] %v270
    %307 = vst [vmem:[#allocation8 + $0x48] sm:$0xff] %v294
    %308 = vst [vmem:[#allocation8 + $0x50] sm:$0xff] %v272
    %309 = vst [vmem:[#allocation8 + $0x58] sm:$0xff] %v296
    // Predicated region
    $region30: #{tpu_custom_call.1} parent=1 // pred_check
      _
    $region31: #{tpu_custom_call.1} parent=1 // pred_check_branch
      %311 = sbr.rel (0) target = $region33
    $region32: #{tpu_custom_call.1} parent=1 // pred_region
      %313 = vsyncadd [#allocation4], 0
      %s314 = sshll.u32 [#allocation8], 4
      %s315 = int_to_ptr.vmem [resolvable:$true] %s314
      %s316 = sshll.u32 %s4, 4
      %s317 = int_to_ptr.hbm [resolvable:$true] %s316
      %322 = dma.vmem_to_hbm [thread:$0]  %s315, 1536, %s317, [#allocation4], 256, 256, 16
    $region33: #{tpu_custom_call.1} parent=1 // pred_fallthru
      _
    // Predicated region
    $region34: #{tpu_custom_call.1} parent=1 // pred_check
      _
    $region35: #{tpu_custom_call.1} parent=1 // pred_check_branch
      %324 = sbr.rel (0) target = $region37
    $region36: #{tpu_custom_call.1} parent=1 // pred_region
      %326 = dma.done [#allocation4], 1536
    $region37: #{tpu_custom_call.1} parent=1 // pred_fallthru
      _
    %327 = vsyncpa [#allocation3], 1
    %328 = vsyncpa [#allocation6], 1
    %329 = vsyncpa [#allocation4], 1

</llo_original>
